<compile_context>
chip_gen: v7x
topology: tpu7x:2x2x1
jax: 0.10.0
libtpu: 0.0.40
codegen_flags: <defaults>
</compile_context>

<pallas_src>
import jax
import jax.numpy as jnp
from jax.experimental import pallas as pl
from jax.experimental.pallas import tpu as pltpu

K = 256  # reduction dim fixed by the module (weight = ones(256, 256))
N = 256  # output dim


def matmul_kernel(y_ref, w_ref, o_ref):
    # Full K and N fit in VMEM, so one MXU matmul per M-tile, f32 accumulation.
    o_ref[...] = jnp.dot(
        y_ref[...], w_ref[...], preferred_element_type=jnp.float32
    ).astype(o_ref.dtype)


def _round_up8(x):
    return ((x + 7) // 8) * 8


def _choose_tile(M, tm):
    # Tiny-M collapse: a single sublane-aligned block covering all rows.
    tm_eff = min(tm, _round_up8(M))
    grid_m = pl.cdiv(M, tm_eff)
    # v7x has 2 TensorCores sharding the parallel axis: prefer an even tile
    # count when tiled (free ~2x on large M, harmless on 1-TC chips).
    if grid_m > 1 and grid_m % 2 == 1:
        tm_eff = _round_up8(pl.cdiv(M, grid_m + 1))
        grid_m = pl.cdiv(M, tm_eff)
    return tm_eff, grid_m


def matmul(y, w, *, tm=2048):
    orig_shape = y.shape
    assert orig_shape[-1] == K, f"last dim must be {K}"
    y2 = y.reshape(-1, K)
    M = y2.shape[0]

    tm_eff, grid_m = _choose_tile(M, tm)

    cost = pl.CostEstimate(
        flops=2 * M * K * N,
        bytes_accessed=4 * (M * K + K * N + M * N),
        transcendentals=0,
    )

    out = pl.pallas_call(
        matmul_kernel,
        out_shape=jax.ShapeDtypeStruct((M, N), y.dtype),
        grid_spec=pltpu.PrefetchScalarGridSpec(
            num_scalar_prefetch=0,
            grid=(grid_m,),
            in_specs=[
                # y: one M-tile per grid step (partial last block masked,
                # default double-buffering streams it).
                pl.BlockSpec((tm_eff, K), lambda i: (i, 0)),
                # W: same (only) block every step -> VMEM-resident; single
                # buffer, the second one would never be used.
                pl.BlockSpec((K, N), lambda i: (0, 0),
                             pipeline_mode=pl.Buffered(1)),
            ],
            out_specs=pl.BlockSpec((tm_eff, N), lambda i: (i, 0)),
        ),
        compiler_params=pltpu.CompilerParams(
            dimension_semantics=("parallel",),
            vmem_limit_bytes=32 * 1024 * 1024,
        ),
        cost_estimate=cost,
    )(y2, w)

    return out.reshape(*orig_shape[:-1], N)


if __name__ == "__main__":
    key = jax.random.PRNGKey(0)
    # Deterministic parameter init matching torch.ones(256, 256).
    w = jnp.ones((K, N), dtype=jnp.float32)

    # Small input consistent with the forward: y of shape (batch, seq, 256).
    y_small = jax.random.normal(key, (2, 8, K), dtype=jnp.float32)
    out_small = jax.block_until_ready(matmul(y_small, w))
    ref_small = jnp.matmul(y_small, w, precision=jax.lax.Precision.HIGHEST)
    assert out_small.shape == ref_small.shape
    assert jnp.allclose(out_small, ref_small, atol=1e-3, rtol=1e-4)

    # Exercise the tiled path: M=4104 with tm=2048 would give an odd grid (3),
    # so the tile is shrunk to give an even grid with a masked partial block.
    key2 = jax.random.fold_in(key, 1)
    y_big = jax.random.normal(key2, (4104, K), dtype=jnp.float32)
    out_big = jax.block_until_ready(matmul(y_big, w))
    ref_big = jnp.matmul(y_big, w, precision=jax.lax.Precision.HIGHEST)
    assert out_big.shape == ref_big.shape
    assert jnp.allclose(out_big, ref_big, atol=1e-3, rtol=1e-4)

    print("KERNEL_OK")
</pallas_src>

<mosaic_0001>
module attributes {stable_mosaic.version = 11 : i64} {
  func.func @matmul_kernel(%arg0: i32, %arg1: memref<16x256xf32, #tpu.memory_space<vmem>>, %arg2: memref<256x256xf32, #tpu.memory_space<vmem>>, %arg3: memref<16x256xf32, #tpu.memory_space<vmem>>) attributes {dimension_semantics = [#tpu.dimension_semantics<parallel>], iteration_bounds = array<i64: 1>, scalar_prefetch = 0 : i64, scratch_operands = 0 : i64, tpu.core_type = #tpu.core_type<tc>, window_params = [{transform_indices = @transform_0, window_bounds = array<i64: 16, 256>}, {pipeline_mode = #tpu.pipeline_mode<synchronous>, transform_indices = @transform_1, window_bounds = array<i64: 256, 256>}, {transform_indices = @transform_2, window_bounds = array<i64: 16, 256>}]} {
    %c0 = arith.constant 0 : index
    %c0_0 = arith.constant 0 : index
    %0 = vector.load %arg1[%c0, %c0_0] : memref<16x256xf32, #tpu.memory_space<vmem>>, vector<16x256xf32>
    %c0_1 = arith.constant 0 : index
    %c0_2 = arith.constant 0 : index
    %1 = vector.load %arg2[%c0_1, %c0_2] : memref<256x256xf32, #tpu.memory_space<vmem>>, vector<256x256xf32>
    %cst = arith.constant dense<0.000000e+00> : vector<16x256xf32>
    %2 = tpu.matmul %0, %1, %cst {dimension_numbers = #tpu.dot_dimension_numbers<[1], [0], [0], [1], [0, 0, 1, 1], [], []>} : vector<16x256xf32>, vector<256x256xf32>, vector<16x256xf32> -> vector<16x256xf32>
    %c0_3 = arith.constant 0 : index
    %c0_4 = arith.constant 0 : index
    %3 = vector.load %arg3[%c0_3, %c0_4] : memref<16x256xf32, #tpu.memory_space<vmem>>, vector<16x256xf32>
    tpu.vector_store %arg3[%c0_3, %c0_4], %2 {strides = array<i32>} : memref<16x256xf32, #tpu.memory_space<vmem>>, vector<16x256xf32>,
    return
  }
  func.func @transform_0(%arg0: i32) -> (i32, i32) {
    %c0_i32 = arith.constant 0 : i32
    %c0_i32_0 = arith.constant 0 : i32
    return %arg0, %c0_i32 : i32, i32
  }
  func.func @transform_1(%arg0: i32) -> (i32, i32) {
    %c0_i32 = arith.constant 0 : i32
    %c0_i32_0 = arith.constant 0 : i32
    %c0_i32_1 = arith.constant 0 : i32
    return %c0_i32, %c0_i32_0 : i32, i32
  }
  func.func @transform_2(%arg0: i32) -> (i32, i32) {
    %c0_i32 = arith.constant 0 : i32
    %c0_i32_0 = arith.constant 0 : i32
    return %arg0, %c0_i32 : i32, i32
  }
}

</mosaic_0001>

<llo_original>
// kernel: tpu_custom_call.1
$region0: #{tpu_custom_call.1}
  #allocation0 [shape = 'u32[]', space=smem, size = 0x4, offset = 0x4, fixed_abs, tag = 'smem constant byte address 0x4 - core index']
  #allocation1 [shape = 'u32[144,128]{1,0:T(1,128)}', space=vmem, size = 0x12000, scoped, tag = 'internal scratch']
  %s0 = inlined_call_operand.hbm [shape: f32[16,256], index: 0, kind: input, shape index: {}]
  %s1 = inlined_call_operand.hbm [shape: f32[256,256], index: 1, kind: input, shape index: {}]
  %s2 = inlined_call_operand.hbm [shape: f32[16,256], index: 2, kind: output, shape index: {}]
  %s3 = sld [smem:[#allocation0]]
  $region26: #{tpu_custom_call.1} parent=0
    _
  %s5 = ssub.s32 1, %s3
  %s6 = scalar_select 0, %s5, %s3
  $region1: #{tpu_custom_call.1} parent=0
    #allocation2 [shape = 'u8[16384]{0}', space=vmem, size = 0x4000, scoped, tag = 'input window, operand 0, single buffered']
    #allocation3 [shape = 's32[1]{0}', space=sflag, size = 0x4, scoped, tag = 'scoped memory for tpu_custom_call.1']
    #allocation4 [shape = 's32[1]{0}', space=sflag, size = 0x4, scoped, tag = 'scoped memory for tpu_custom_call.1']
    #allocation5 [shape = 'u8[262144]{0}', space=vmem, size = 0x40000, scoped, tag = 'input window, operand 1, single buffered']
    #allocation6 [shape = 's32[1]{0}', space=sflag, size = 0x4, scoped, tag = 'scoped memory for tpu_custom_call.1']
    #allocation7 [shape = 'u8[16384]{0}', space=vmem, size = 0x4000, scoped, tag = 'output window, operand 0, single buffered']
    %7 = vsyncpa [#allocation3], 0
    %8 = vsyncpa [#allocation6], 0
    %9 = vsyncpa [#allocation4], 0
    // Predicated region
    $region2: #{tpu_custom_call.1} parent=1 // pred_check
      _
    $region3: #{tpu_custom_call.1} parent=1 // pred_check_branch
      %11 = sbr.rel (0) target = $region5
    $region4: #{tpu_custom_call.1} parent=1 // pred_region
      %s13 = ssub.s32 512, 512
      %14 = vsyncadd [#allocation3], %s13
      %s15 = sshll.u32 [#allocation2], 4
      %s16 = int_to_ptr.vmem [resolvable:$true] %s15
      %21 = dma.hbm_to_vmem [thread:$0]  %s0, 512, %s16, [#allocation3], 256, 256, 16
    $region5: #{tpu_custom_call.1} parent=1 // pred_fallthru
      _
    // Predicated region
    $region6: #{tpu_custom_call.1} parent=1 // pred_check
      _
    $region7: #{tpu_custom_call.1} parent=1 // pred_check_branch
      %23 = sbr.rel (0) target = $region9
    $region8: #{tpu_custom_call.1} parent=1 // pred_region
      %s25 = ssub.s32 8192, 8192
      %26 = vsyncadd [#allocation6], %s25
      %s27 = sshll.u32 [#allocation5], 4
      %s28 = int_to_ptr.vmem [resolvable:$true] %s27
      %33 = dma.hbm_to_vmem [thread:$0]  %s1, 8192, %s28, [#allocation6], 256, 256, 16
    $region9: #{tpu_custom_call.1} parent=1 // pred_fallthru
      _
    // Predicated region
    $region10: #{tpu_custom_call.1} parent=1 // pred_check
      _
    $region11: #{tpu_custom_call.1} parent=1 // pred_check_branch
      %35 = sbr.rel (0) target = $region13
    $region12: #{tpu_custom_call.1} parent=1 // pred_region
      %36 = dma.done [#allocation3], 512
    $region13: #{tpu_custom_call.1} parent=1 // pred_fallthru
      _
    // Predicated region
    $region14: #{tpu_custom_call.1} parent=1 // pred_check
      _
    $region15: #{tpu_custom_call.1} parent=1 // pred_check_branch
      %38 = sbr.rel (0) target = $region17
    $region16: #{tpu_custom_call.1} parent=1 // pred_region
      %39 = dma.done [#allocation6], 8192
    $region17: #{tpu_custom_call.1} parent=1 // pred_fallthru
      _
    %v40 = vld [vmem:[#allocation2] sm:$0xff]
    %v41 = vld [vmem:[#allocation2 + $0x8] sm:$0xff]
    %v42 = vld [vmem:[#allocation2 + $0x10] sm:$0xff]
    %v43 = vld [vmem:[#allocation2 + $0x18] sm:$0xff]
    %v44 = vld [vmem:[#allocation5] sm:$0xff]
    %v45 = vld [vmem:[#allocation5 + $0x8] sm:$0xff]
    %v46 = vld [vmem:[#allocation5 + $0x10] sm:$0xff]
    %v47 = vld [vmem:[#allocation5 + $0x18] sm:$0xff]
    %v48 = vld [vmem:[#allocation5 + $0x20] sm:$0xff]
    %v49 = vld [vmem:[#allocation5 + $0x28] sm:$0xff]
    %v50 = vld [vmem:[#allocation5 + $0x30] sm:$0xff]
    %v51 = vld [vmem:[#allocation5 + $0x38] sm:$0xff]
    %v52 = vld [vmem:[#allocation5 + $0x40] sm:$0xff]
    %v53 = vld [vmem:[#allocation5 + $0x48] sm:$0xff]
    %v54 = vld [vmem:[#allocation5 + $0x50] sm:$0xff]
    %v55 = vld [vmem:[#allocation5 + $0x58] sm:$0xff]
    %v56 = vld [vmem:[#allocation5 + $0x60] sm:$0xff]
    %v57 = vld [vmem:[#allocation5 + $0x68] sm:$0xff]
    %v58 = vld [vmem:[#allocation5 + $0x70] sm:$0xff]
    %v59 = vld [vmem:[#allocation5 + $0x78] sm:$0xff]
    %v60 = vld [vmem:[#allocation5 + $0x80] sm:$0xff]
    %v61 = vld [vmem:[#allocation5 + $0x88] sm:$0xff]
    %v62 = vld [vmem:[#allocation5 + $0x90] sm:$0xff]
    %v63 = vld [vmem:[#allocation5 + $0x98] sm:$0xff]
    %v64 = vld [vmem:[#allocation5 + $0xa0] sm:$0xff]
    %v65 = vld [vmem:[#allocation5 + $0xa8] sm:$0xff]
    %v66 = vld [vmem:[#allocation5 + $0xb0] sm:$0xff]
    %v67 = vld [vmem:[#allocation5 + $0xb8] sm:$0xff]
    %v68 = vld [vmem:[#allocation5 + $0xc0] sm:$0xff]
    %v69 = vld [vmem:[#allocation5 + $0xc8] sm:$0xff]
    %v70 = vld [vmem:[#allocation5 + $0xd0] sm:$0xff]
    %v71 = vld [vmem:[#allocation5 + $0xd8] sm:$0xff]
    %v72 = vld [vmem:[#allocation5 + $0xe0] sm:$0xff]
    %v73 = vld [vmem:[#allocation5 + $0xe8] sm:$0xff]
    %v74 = vld [vmem:[#allocation5 + $0xf0] sm:$0xff]
    %v75 = vld [vmem:[#allocation5 + $0xf8] sm:$0xff]
    %v76 = vld [vmem:[#allocation5 + $0x100] sm:$0xff]
    %v77 = vld [vmem:[#allocation5 + $0x108] sm:$0xff]
    %v78 = vld [vmem:[#allocation5 + $0x110] sm:$0xff]
    %v79 = vld [vmem:[#allocation5 + $0x118] sm:$0xff]
    %v80 = vld [vmem:[#allocation5 + $0x120] sm:$0xff]
    %v81 = vld [vmem:[#allocation5 + $0x128] sm:$0xff]
    %v82 = vld [vmem:[#allocation5 + $0x130] sm:$0xff]
    %v83 = vld [vmem:[#allocation5 + $0x138] sm:$0xff]
    %v84 = vld [vmem:[#allocation5 + $0x140] sm:$0xff]
    %v85 = vld [vmem:[#allocation5 + $0x148] sm:$0xff]
    %v86 = vld [vmem:[#allocation5 + $0x150] sm:$0xff]
    %v87 = vld [vmem:[#allocation5 + $0x158] sm:$0xff]
    %v88 = vld [vmem:[#allocation5 + $0x160] sm:$0xff]
    %v89 = vld [vmem:[#allocation5 + $0x168] sm:$0xff]
    %v90 = vld [vmem:[#allocation5 + $0x170] sm:$0xff]
    %v91 = vld [vmem:[#allocation5 + $0x178] sm:$0xff]
    %v92 = vld [vmem:[#allocation5 + $0x180] sm:$0xff]
    %v93 = vld [vmem:[#allocation5 + $0x188] sm:$0xff]
    %v94 = vld [vmem:[#allocation5 + $0x190] sm:$0xff]
    %v95 = vld [vmem:[#allocation5 + $0x198] sm:$0xff]
    %v96 = vld [vmem:[#allocation5 + $0x1a0] sm:$0xff]
    %v97 = vld [vmem:[#allocation5 + $0x1a8] sm:$0xff]
    %v98 = vld [vmem:[#allocation5 + $0x1b0] sm:$0xff]
    %v99 = vld [vmem:[#allocation5 + $0x1b8] sm:$0xff]
    %v100 = vld [vmem:[#allocation5 + $0x1c0] sm:$0xff]
    %v101 = vld [vmem:[#allocation5 + $0x1c8] sm:$0xff]
    %v102 = vld [vmem:[#allocation5 + $0x1d0] sm:$0xff]
    %v103 = vld [vmem:[#allocation5 + $0x1d8] sm:$0xff]
    %v104 = vld [vmem:[#allocation5 + $0x1e0] sm:$0xff]
    %v105 = vld [vmem:[#allocation5 + $0x1e8] sm:$0xff]
    %v106 = vld [vmem:[#allocation5 + $0x1f0] sm:$0xff]
    %v107 = vld [vmem:[#allocation5 + $0x1f8] sm:$0xff]
    %108 = vmatprep.subr.mxu0 %v45
    %109 = vmatpush1.msra.mxu0 %v44
    %110 = vmatprep.subr.mxu0 %v47
    %111 = vmatpush1.msra.mxu0 %v46
    %112 = vmatprep.subr.mxu0 %v49
    %113 = vmatpush1.msra.mxu0 %v48
    %114 = vmatprep.subr.mxu0 %v51
    %115 = vmatpush1.msra.mxu0 %v50
    %116 = vmatprep.subr.mxu0 %v53
    %117 = vmatpush1.msra.mxu0 %v52
    %118 = vmatprep.subr.mxu0 %v55
    %119 = vmatpush1.msra.mxu0 %v54
    %120 = vmatprep.subr.mxu0 %v57
    %121 = vmatpush1.msra.mxu0 %v56
    %122 = vmatprep.subr.mxu0 %v59
    %123 = vmatpush1.msra.mxu0 %v58
    %124 = vmatprep.subr.mxu0 %v61
    %125 = vmatpush1.msra.mxu0 %v60
    %126 = vmatprep.subr.mxu0 %v63
    %127 = vmatpush1.msra.mxu0 %v62
    %128 = vmatprep.subr.mxu0 %v65
    %129 = vmatpush1.msra.mxu0 %v64
    %130 = vmatprep.subr.mxu0 %v67
    %131 = vmatpush1.msra.mxu0 %v66
    %132 = vmatprep.subr.mxu0 %v69
    %133 = vmatpush1.msra.mxu0 %v68
    %134 = vmatprep.subr.mxu0 %v71
    %135 = vmatpush1.msra.mxu0 %v70
    %136 = vmatprep.subr.mxu0 %v73
    %137 = vmatpush1.msra.mxu0 %v72
    %138 = vmatprep.subr.mxu0 %v75
    %139 = vmatpush1.msra.mxu0 %v74
    %140 = vmatprep.subr.mxu0 %v77
    %141 = vmatpush1.msra.mxu0 %v76
    %142 = vmatprep.subr.mxu0 %v79
    %143 = vmatpush1.msra.mxu0 %v78
    %144 = vmatprep.subr.mxu0 %v81
    %145 = vmatpush1.msra.mxu0 %v80
    %146 = vmatprep.subr.mxu0 %v83
    %147 = vmatpush1.msra.mxu0 %v82
    %148 = vmatprep.subr.mxu0 %v85
    %149 = vmatpush1.msra.mxu0 %v84
    %150 = vmatprep.subr.mxu0 %v87
    %151 = vmatpush1.msra.mxu0 %v86
    %152 = vmatprep.subr.mxu0 %v89
    %153 = vmatpush1.msra.mxu0 %v88
    %154 = vmatprep.subr.mxu0 %v91
    %155 = vmatpush1.msra.mxu0 %v90
    %156 = vmatprep.subr.mxu0 %v93
    %157 = vmatpush1.msra.mxu0 %v92
    %158 = vmatprep.subr.mxu0 %v95
    %159 = vmatpush1.msra.mxu0 %v94
    %160 = vmatprep.subr.mxu0 %v97
    %161 = vmatpush1.msra.mxu0 %v96
    %162 = vmatprep.subr.mxu0 %v99
    %163 = vmatpush1.msra.mxu0 %v98
    %164 = vmatprep.subr.mxu0 %v101
    %165 = vmatpush1.msra.mxu0 %v100
    %166 = vmatprep.subr.mxu0 %v103
    %167 = vmatpush1.msra.mxu0 %v102
    %168 = vmatprep.subr.mxu0 %v105
    %169 = vmatpush1.msra.mxu0 %v104
    %170 = vmatprep.subr.mxu0 %v107
    %171 = vmatpush1.msra.mxu0 %v106
    %172 = vmatprep.mubr.f32.mxu0 %v41
    %173 = vmatmul.mubr.f32.gmra.mrb[0].mxu0 %v40
    %v174 = vpop.f32.mrb[0].mxu0
    %v175 = vadd.f32 0.0, %v174
    %v176 = vpop.f32.mrb[0].mxu0
    %v177 = vadd.f32 0.0, %v176
    %178 = vmatprep.mubr.f32.mxu0 %v43
    %179 = vmatmul.mubr.f32.gmra.mrb[0].mxu0 %v42
    %v180 = vpop.f32.mrb[0].mxu0
    %v181 = vadd.f32 0.0, %v180
    %v182 = vpop.f32.mrb[0].mxu0
    %v183 = vadd.f32 0.0, %v182
    %184 = vdwg.mxu0
    %185 = vst [vmem:[#allocation7] sm:$0xff] %v175
    %186 = vst [vmem:[#allocation7 + $0x8] sm:$0xff] %v177
    %187 = vst [vmem:[#allocation7 + $0x10] sm:$0xff] %v181
    %188 = vst [vmem:[#allocation7 + $0x18] sm:$0xff] %v183
    // Predicated region
    $region18: #{tpu_custom_call.1} parent=1 // pred_check
      _
    $region19: #{tpu_custom_call.1} parent=1 // pred_check_branch
      %190 = sbr.rel (0) target = $region21
    $region20: #{tpu_custom_call.1} parent=1 // pred_region
      %s192 = ssub.s32 512, 512
      %193 = vsyncadd [#allocation4], %s192
      %s194 = sshll.u32 [#allocation7], 4
      %s195 = int_to_ptr.vmem [resolvable:$true] %s194
      %200 = dma.vmem_to_hbm [thread:$0]  %s195, 512, %s2, [#allocation4], 256, 256, 16
    $region21: #{tpu_custom_call.1} parent=1 // pred_fallthru
      _
    // Predicated region
    $region22: #{tpu_custom_call.1} parent=1 // pred_check
      _
    $region23: #{tpu_custom_call.1} parent=1 // pred_check_branch
      %202 = sbr.rel (0) target = $region25
    $region24: #{tpu_custom_call.1} parent=1 // pred_region
      %203 = dma.done [#allocation4], 512
    $region25: #{tpu_custom_call.1} parent=1 // pred_fallthru
      _
    %204 = vsyncpa [#allocation3], 1
    %205 = vsyncpa [#allocation6], 1
    %206 = vsyncpa [#allocation4], 1

</llo_original>
